<compile_context>
chip_gen: v5e
topology: v5e:2x2
jax: 0.10.0
libtpu: 0.0.40
codegen_flags: <defaults>
</compile_context>

<pallas_src>
import jax
import jax.numpy as jnp
from jax.experimental import pallas as pl
from jax.experimental.pallas import tpu as pltpu


def _vmem_capacity_bytes():
    try:
        cap = getattr(pltpu.get_tpu_info(), "vmem_capacity_bytes", None)
        if cap:
            return int(cap)
    except Exception:
        pass
    return 64 * 1024 * 1024  # conservative default (v7x per-core VMEM)


# ----------------------------------------------------------------------------
# Fused single-pass kernel: whole per-batch slab resident in VMEM.
#   x block : (1, C, HW)   channels on sublanes, pixels on lanes
#   wstack  : (8, C)  rows: 0 = w_phi, 1 = w_g / N, 2 = w_theta, rest zero
#   bstack  : (8, 1)  matching biases
#   wout    : (C, 1)  W-conv weight * BN scale
#   shift   : (C, 1)  folded BN shift
# ----------------------------------------------------------------------------
def _fused_kernel(x_ref, wstack_ref, bstack_ref, wout_ref, shift_ref, o_ref):
    xt = x_ref[0].astype(jnp.float32)                                  # [C, HW]
    proj = jnp.dot(wstack_ref[...], xt,
                   preferred_element_type=jnp.float32) + bstack_ref[...]  # [8, HW]
    phi = proj[0:1, :]
    g = proj[1:2, :]                       # already carries the 1/N factor
    theta = proj[2:3, :]
    s = jnp.sum(phi * g, axis=1, keepdims=True)                        # [1,1] = S_b/N
    y = theta * s                                                      # [1, HW]
    z = wout_ref[...] * y + shift_ref[...] + xt                        # [C, HW]
    o_ref[0] = z.astype(o_ref.dtype)


# ----------------------------------------------------------------------------
# Two-pass path, pass 1: per-batch reduction  S_b/N = sum_j phi_j * (g_j / N)
#   grid = (B, n_chunks, n_inner); per-(batch, chunk) partials -> (B, n_chunks, 1, 1)
# ----------------------------------------------------------------------------
def _make_stats_kernel(hw, tile_hw, n_inner, needs_mask):
    def stats_kernel(x_ref, wstack_ref, bstack_ref, s_ref):
        t = pl.program_id(2)

        @pl.when(t == 0)
        def _():
            s_ref[...] = jnp.zeros_like(s_ref)

        xt = x_ref[0].astype(jnp.float32)                              # [C, T]
        proj = jnp.dot(wstack_ref[...], xt,
                       preferred_element_type=jnp.float32) + bstack_ref[...]
        pg = proj[0:1, :] * proj[1:2, :]                               # [1, T]
        if needs_mask:
            start = (pl.program_id(1) * n_inner + t) * tile_hw
            col = jax.lax.broadcasted_iota(jnp.int32, pg.shape, 1) + start
            pg = jnp.where(col < hw, pg, 0.0)
        partial = jnp.sum(pg, axis=1, keepdims=True)                   # [1, 1]
        s_ref[...] += partial.reshape(1, 1, 1, 1)
    return stats_kernel


# ----------------------------------------------------------------------------
# Two-pass path, pass 2: z = wout * (theta * S) + shift + x   (lane-dense store)
# ----------------------------------------------------------------------------
def _apply_kernel(x_ref, s_ref, wstack_ref, bstack_ref, wout_ref, shift_ref, o_ref):
    xt = x_ref[0].astype(jnp.float32)                                  # [C, T]
    proj = jnp.dot(wstack_ref[...], xt,
                   preferred_element_type=jnp.float32) + bstack_ref[...]
    theta = proj[2:3, :]                                               # [1, T]
    s = s_ref[0, 0]                                                    # [1, 1]
    for c in range(1, s_ref.shape[1]):                                 # sum chunk partials
        s = s + s_ref[0, c]
    y = theta * s                                                      # [1, T]
    z = wout_ref[...] * y + shift_ref[...] + xt                        # [C, T]
    o_ref[0] = z.astype(o_ref.dtype)


# ----------------------------------------------------------------------------
# Wrapper: NCHW in -> NCHW out (matches PyTorch semantics), no transposes.
# ----------------------------------------------------------------------------
def non_local_forward(x_nchw, w_g, b_g, w_theta, b_theta, w_phi, b_phi,
                      w_W, b_W, gamma, beta, run_mean, run_var, eps=1e-5,
                      *, force_two_pass=False, tile_override=None):
    B, C, H, Wd = x_nchw.shape
    HW = H * Wd
    assert w_g.shape[0] == 1, "Non_local always has inter_channels == 1"

    f32 = jnp.float32
    itemsize = jnp.dtype(x_nchw.dtype).itemsize

    # channels-major, pixel-lane layout: pure reshape, no copy
    x = x_nchw.reshape(B, C, HW)

    inv_n = 1.0 / HW
    # stacked projection weights so phi/g/theta are one MXU matmul per tile;
    # 1/N is folded into the g row (f_div_C) so no separate scaling op exists.
    wstack = jnp.concatenate([
        w_phi.astype(f32).reshape(1, C),
        w_g.astype(f32).reshape(1, C) * inv_n,
        w_theta.astype(f32).reshape(1, C),
        jnp.zeros((5, C), f32)], axis=0)                       # (8, C)
    bstack = jnp.concatenate([
        b_phi.astype(f32).reshape(1, 1),
        b_g.astype(f32).reshape(1, 1) * inv_n,
        b_theta.astype(f32).reshape(1, 1),
        jnp.zeros((5, 1), f32)], axis=0)                       # (8, 1)

    # fold the W conv (1 -> C) and BatchNorm (inference stats) into scale/shift
    bn_scale = gamma.astype(f32) / jnp.sqrt(run_var.astype(f32) + eps)     # [C]
    w_out = (w_W.astype(f32).reshape(C) * bn_scale).reshape(C, 1)
    shift = (b_W.astype(f32) * bn_scale + beta.astype(f32)
             - run_mean.astype(f32) * bn_scale).reshape(C, 1)

    vmem_cap = _vmem_capacity_bytes()
    vmem_limit = int(min(vmem_cap * 3 // 4, 96 * 1024 * 1024))

    slab_bytes = C * HW * itemsize
    fused_ok = (not force_two_pass) and \
        slab_bytes <= min(8 * 1024 * 1024, vmem_cap // 10)

    if fused_ok:
        # -------- single pass: x read once, z written once --------
        z = pl.pallas_call(
            _fused_kernel,
            out_shape=jax.ShapeDtypeStruct((B, C, HW), x_nchw.dtype),
            grid=(B,),
            in_specs=[
                pl.BlockSpec((1, C, HW), lambda b: (b, 0, 0)),
                pl.BlockSpec((8, C), lambda b: (0, 0)),
                pl.BlockSpec((8, 1), lambda b: (0, 0)),
                pl.BlockSpec((C, 1), lambda b: (0, 0)),
                pl.BlockSpec((C, 1), lambda b: (0, 0)),
            ],
            out_specs=pl.BlockSpec((1, C, HW), lambda b: (b, 0, 0)),
            compiler_params=pltpu.CompilerParams(
                dimension_semantics=("parallel",),
                vmem_limit_bytes=vmem_limit),
        )(x, wstack, bstack, w_out, shift)
        return z.reshape(B, C, H, Wd)

    # -------- streaming two-pass path for large feature maps --------
    if tile_override is not None:
        tile_hw = HW if tile_override >= HW else int(tile_override)
        assert tile_hw == HW or tile_hw % 128 == 0
    else:
        # generation-aware tile budget (v7x: ~4 MiB, v5e/v6e: 8 MiB per block)
        tile_budget = min(8 * 1024 * 1024, vmem_cap // 16)
        max_rows = max(128, (tile_budget // (C * itemsize)) // 128 * 128)
        tile_hw = HW if max_rows >= HW else max_rows
    n_t = pl.cdiv(HW, tile_hw)

    # second parallel axis for the stats pass so both v7x TCs get work at B == 1
    n_chunks = 2 if (B == 1 and n_t >= 2 and n_t % 2 == 0) else 1
    n_inner = n_t // n_chunks
    needs_mask = (n_t * tile_hw != HW)

    # ---- pass 1: per-batch scalar S_b/N (chunk partials) ----
    s_partial = pl.pallas_call(
        _make_stats_kernel(HW, tile_hw, n_inner, needs_mask),
        out_shape=jax.ShapeDtypeStruct((B, n_chunks, 1, 1), f32),
        grid=(B, n_chunks, n_inner),
        in_specs=[
            pl.BlockSpec((1, C, tile_hw), lambda b, c, t: (b, 0, c * n_inner + t)),
            pl.BlockSpec((8, C), lambda b, c, t: (0, 0)),
            pl.BlockSpec((8, 1), lambda b, c, t: (0, 0)),
        ],
        out_specs=pl.BlockSpec((1, 1, 1, 1), lambda b, c, t: (b, c, 0, 0)),
        compiler_params=pltpu.CompilerParams(
            dimension_semantics=("parallel", "parallel", "arbitrary"),
            vmem_limit_bytes=vmem_limit),
    )(x, wstack, bstack)

    # ---- pass 2: fused theta-proj + scale + W/BN + residual ----
    z = pl.pallas_call(
        _apply_kernel,
        out_shape=jax.ShapeDtypeStruct((B, C, HW), x_nchw.dtype),
        grid=(B, n_t),
        in_specs=[
            pl.BlockSpec((1, C, tile_hw), lambda b, t: (b, 0, t)),
            pl.BlockSpec((1, n_chunks, 1, 1), lambda b, t: (b, 0, 0, 0)),
            pl.BlockSpec((8, C), lambda b, t: (0, 0)),
            pl.BlockSpec((8, 1), lambda b, t: (0, 0)),
            pl.BlockSpec((C, 1), lambda b, t: (0, 0)),
            pl.BlockSpec((C, 1), lambda b, t: (0, 0)),
        ],
        out_specs=pl.BlockSpec((1, C, tile_hw), lambda b, t: (b, 0, t)),
        compiler_params=pltpu.CompilerParams(
            dimension_semantics=("parallel", "parallel"),
            vmem_limit_bytes=vmem_limit),
    )(x, s_partial, wstack, bstack, w_out, shift)

    return z.reshape(B, C, H, Wd)


# ----------------------------------------------------------------------------
# Pure-JAX reference: faithful translation of the PyTorch forward (materializes
# the HWxHW matrix), used only for the numerical check.
# ----------------------------------------------------------------------------
def reference_forward(x, w_g, b_g, w_th, b_th, w_ph, b_ph,
                      w_W, b_W, gamma, beta, mean, var, eps=1e-5):
    B, C, H, W = x.shape
    HW = H * W
    hp = jax.lax.Precision.HIGHEST

    def proj(w, b):  # 1x1 conv C -> 1, w: [1, C], b: [1]
        t = jnp.einsum('bchw,oc->bohw', x, w, precision=hp) + b[None, :, None, None]
        return t.reshape(B, 1, HW)

    g_x = proj(w_g, b_g).transpose(0, 2, 1)        # (B, HW, 1)
    theta_x = proj(w_th, b_th).transpose(0, 2, 1)  # (B, HW, 1)
    phi_x = proj(w_ph, b_ph)                       # (B, 1, HW)
    f = jnp.matmul(theta_x, phi_x, precision=hp)   # (B, HW, HW)
    f_div_C = f / HW
    y = jnp.matmul(f_div_C, g_x, precision=hp)     # (B, HW, 1)
    y = y.transpose(0, 2, 1).reshape(B, 1, H, W)
    W_y = jnp.einsum('bchw,oc->bohw', y, w_W, precision=hp) + b_W[None, :, None, None]
    inv = 1.0 / jnp.sqrt(var + eps)
    W_y = (W_y - mean[None, :, None, None]) * (gamma * inv)[None, :, None, None] \
        + beta[None, :, None, None]
    return W_y + x


if __name__ == "__main__":
    def make_params(key, C):
        ks = jax.random.split(key, 12)
        w_g = jax.random.normal(ks[0], (1, C), jnp.float32) * 0.05
        b_g = jax.random.normal(ks[1], (1,), jnp.float32) * 0.05
        w_th = jax.random.normal(ks[2], (1, C), jnp.float32) * 0.05
        b_th = jax.random.normal(ks[3], (1,), jnp.float32) * 0.05
        w_ph = jax.random.normal(ks[4], (1, C), jnp.float32) * 0.05
        b_ph = jax.random.normal(ks[5], (1,), jnp.float32) * 0.05
        w_W = jax.random.normal(ks[6], (C, 1), jnp.float32) * 0.05
        b_W = jax.random.normal(ks[7], (C,), jnp.float32) * 0.05
        # NOTE: the module inits BN gamma/beta to 0 (making W_y == 0, z == x);
        # use nonzero values so the test exercises the full math path.
        gamma = jax.random.uniform(ks[8], (C,), jnp.float32, 0.5, 1.5)
        beta = jax.random.normal(ks[9], (C,), jnp.float32) * 0.1
        mean = jax.random.normal(ks[10], (C,), jnp.float32) * 0.1
        var = jax.random.uniform(ks[11], (C,), jnp.float32, 0.5, 1.5)
        return (w_g, b_g, w_th, b_th, w_ph, b_ph, w_W, b_W, gamma, beta, mean, var)

    key = jax.random.PRNGKey(0)

    # cfg 1: fused single-pass path (B=2, C=128, 16x16)
    # cfg 2: two-pass streaming path with ragged HW (tail mask) + chunk split (B=1)
    # cfg 3: two-pass streaming path with exact tiling, B=2
    configs = [
        dict(B=2, C=128, H=16, W=16, force_two_pass=False, tile_override=None),
        dict(B=1, C=64, H=20, W=20, force_two_pass=True, tile_override=128),
        dict(B=2, C=128, H=16, W=16, force_two_pass=True, tile_override=128),
    ]

    for i, cfg in enumerate(configs):
        kx, kp, key = jax.random.split(key, 3)
        B, C, H, W = cfg["B"], cfg["C"], cfg["H"], cfg["W"]
        x = jax.random.normal(kx, (B, C, H, W), jnp.float32)
        params = make_params(kp, C)

        out = jax.block_until_ready(
            non_local_forward(x, *params,
                              force_two_pass=cfg["force_two_pass"],
                              tile_override=cfg["tile_override"]))
        ref = reference_forward(x, *params)

        assert out.shape == (B, C, H, W), (i, out.shape)
        max_err = float(jnp.max(jnp.abs(out - ref)))
        assert jnp.allclose(out, ref, atol=2e-3, rtol=2e-3), (i, max_err)

    print("KERNEL_OK")
</pallas_src>

<mosaic_0001>
module attributes {stable_mosaic.version = 11 : i64} {
  func.func @_fused_kernel(%arg0: i32, %arg1: memref<1x128x256xf32, #tpu.memory_space<vmem>>, %arg2: memref<8x128xf32, #tpu.memory_space<vmem>>, %arg3: memref<8x1xf32, #tpu.memory_space<vmem>>, %arg4: memref<128x1xf32, #tpu.memory_space<vmem>>, %arg5: memref<128x1xf32, #tpu.memory_space<vmem>>, %arg6: memref<1x128x256xf32, #tpu.memory_space<vmem>>) attributes {dimension_semantics = [#tpu.dimension_semantics<parallel>], iteration_bounds = array<i64: 2>, scalar_prefetch = 0 : i64, scratch_operands = 0 : i64, tpu.core_type = #tpu.core_type<tc>, window_params = [{transform_indices = @transform_0, window_bounds = array<i64: 1, 128, 256>}, {pipeline_mode = #tpu.pipeline_mode<synchronous>, transform_indices = @transform_1, window_bounds = array<i64: 8, 128>}, {pipeline_mode = #tpu.pipeline_mode<synchronous>, transform_indices = @transform_2, window_bounds = array<i64: 8, 1>}, {pipeline_mode = #tpu.pipeline_mode<synchronous>, transform_indices = @transform_3, window_bounds = array<i64: 128, 1>}, {pipeline_mode = #tpu.pipeline_mode<synchronous>, transform_indices = @transform_4, window_bounds = array<i64: 128, 1>}, {transform_indices = @transform_5, window_bounds = array<i64: 1, 128, 256>}]} {
    %c0 = arith.constant 0 : index
    %c0_0 = arith.constant 0 : index
    %c0_1 = arith.constant 0 : index
    %0 = vector.load %arg1[%c0, %c0_0, %c0_1] : memref<1x128x256xf32, #tpu.memory_space<vmem>>, vector<1x128x256xf32>
    %1 = vector.shape_cast %0 : vector<1x128x256xf32> to vector<128x256xf32>
    %c0_2 = arith.constant 0 : index
    %c0_3 = arith.constant 0 : index
    %2 = vector.load %arg2[%c0_2, %c0_3] : memref<8x128xf32, #tpu.memory_space<vmem>>, vector<8x128xf32>
    %cst = arith.constant dense<0.000000e+00> : vector<8x256xf32>
    %3 = tpu.matmul %2, %1, %cst {dimension_numbers = #tpu.dot_dimension_numbers<[1], [0], [0], [1], [0, 0, 1, 1], [], []>} : vector<8x128xf32>, vector<128x256xf32>, vector<8x256xf32> -> vector<8x256xf32>
    %c0_4 = arith.constant 0 : index
    %c0_5 = arith.constant 0 : index
    %4 = vector.load %arg3[%c0_4, %c0_5] : memref<8x1xf32, #tpu.memory_space<vmem>>, vector<8x1xf32>
    %5 = vector.broadcast %4 : vector<8x1xf32> to vector<8x256xf32>
    %6 = arith.addf %3, %5 : vector<8x256xf32>
    %7 = vector.extract_strided_slice %6 {offsets = [0, 0], sizes = [1, 256], strides = [1, 1]} : vector<8x256xf32> to vector<1x256xf32>
    %8 = vector.extract_strided_slice %6 {offsets = [1, 0], sizes = [1, 256], strides = [1, 1]} : vector<8x256xf32> to vector<1x256xf32>
    %9 = vector.extract_strided_slice %6 {offsets = [2, 0], sizes = [1, 256], strides = [1, 1]} : vector<8x256xf32> to vector<1x256xf32>
    %10 = arith.mulf %7, %8 : vector<1x256xf32>
    %cst_6 = arith.constant dense<0.000000e+00> : vector<1xf32>
    %11 = vector.multi_reduction <add>, %10, %cst_6 [1] : vector<1x256xf32> to vector<1xf32>
    %12 = vector.shape_cast %11 : vector<1xf32> to vector<1x1xf32>
    %13 = vector.broadcast %12 : vector<1x1xf32> to vector<1x256xf32>
    %14 = arith.mulf %9, %13 : vector<1x256xf32>
    %c0_7 = arith.constant 0 : index
    %c0_8 = arith.constant 0 : index
    %15 = vector.load %arg4[%c0_7, %c0_8] : memref<128x1xf32, #tpu.memory_space<vmem>>, vector<128x1xf32>
    %16 = vector.broadcast %15 : vector<128x1xf32> to vector<128x256xf32>
    %17 = vector.broadcast %14 : vector<1x256xf32> to vector<128x256xf32>
    %18 = arith.mulf %16, %17 : vector<128x256xf32>
    %c0_9 = arith.constant 0 : index
    %c0_10 = arith.constant 0 : index
    %19 = vector.load %arg5[%c0_9, %c0_10] : memref<128x1xf32, #tpu.memory_space<vmem>>, vector<128x1xf32>
    %20 = vector.broadcast %19 : vector<128x1xf32> to vector<128x256xf32>
    %21 = arith.addf %18, %20 : vector<128x256xf32>
    %22 = arith.addf %21, %1 : vector<128x256xf32>
    %c0_11 = arith.constant 0 : index
    %c0_12 = arith.constant 0 : index
    %c0_13 = arith.constant 0 : index
    %23 = vector.load %arg6[%c0_11, %c0_12, %c0_13] : memref<1x128x256xf32, #tpu.memory_space<vmem>>, vector<1x128x256xf32>
    %24 = vector.shape_cast %23 : vector<1x128x256xf32> to vector<128x256xf32>
    %25 = vector.shape_cast %22 : vector<128x256xf32> to vector<1x128x256xf32>
    tpu.vector_store %arg6[%c0_11, %c0_12, %c0_13], %25 {strides = array<i32>} : memref<1x128x256xf32, #tpu.memory_space<vmem>>, vector<1x128x256xf32>,
    return
  }
  func.func @transform_0(%arg0: i32) -> (i32, i32, i32) {
    %c0_i32 = arith.constant 0 : i32
    %c0_i32_0 = arith.constant 0 : i32
    %c0_i32_1 = arith.constant 0 : i32
    return %arg0, %c0_i32, %c0_i32_0 : i32, i32, i32
  }
  func.func @transform_1(%arg0: i32) -> (i32, i32) {
    %c0_i32 = arith.constant 0 : i32
    %c0_i32_0 = arith.constant 0 : i32
    %c0_i32_1 = arith.constant 0 : i32
    return %c0_i32, %c0_i32_0 : i32, i32
  }
  func.func @transform_2(%arg0: i32) -> (i32, i32) {
    %c0_i32 = arith.constant 0 : i32
    %c0_i32_0 = arith.constant 0 : i32
    %c0_i32_1 = arith.constant 0 : i32
    return %c0_i32, %c0_i32_0 : i32, i32
  }
  func.func @transform_3(%arg0: i32) -> (i32, i32) {
    %c0_i32 = arith.constant 0 : i32
    %c0_i32_0 = arith.constant 0 : i32
    %c0_i32_1 = arith.constant 0 : i32
    return %c0_i32, %c0_i32_0 : i32, i32
  }
  func.func @transform_4(%arg0: i32) -> (i32, i32) {
    %c0_i32 = arith.constant 0 : i32
    %c0_i32_0 = arith.constant 0 : i32
    %c0_i32_1 = arith.constant 0 : i32
    return %c0_i32, %c0_i32_0 : i32, i32
  }
  func.func @transform_5(%arg0: i32) -> (i32, i32, i32) {
    %c0_i32 = arith.constant 0 : i32
    %c0_i32_0 = arith.constant 0 : i32
    %c0_i32_1 = arith.constant 0 : i32
    return %arg0, %c0_i32, %c0_i32_0 : i32, i32, i32
  }
}

</mosaic_0001>

<llo_original>
// kernel: tpu_custom_call.1
$region0: #{tpu_custom_call.1}
  #allocation0 [shape = 'u32[]', space=smem, size = 0x4, offset = 0x4, fixed_abs, tag = 'smem constant byte address 0x4 - core index']
  #allocation1 [shape = 'u32[72,128]{1,0:T(1,128)}', space=vmem, size = 0x9000, scoped, tag = 'internal scratch']
  %s0 = inlined_call_operand.hbm [shape: f32[2,128,256], index: 0, kind: input, shape index: {}]
  %s1 = inlined_call_operand.vmem [shape: f32[8,128], index: 1, kind: input, shape index: {}]
  %s2 = inlined_call_operand.vmem [shape: f32[8,1], index: 2, kind: input, shape index: {}]
  %s3 = inlined_call_operand.vmem [shape: f32[128,1], index: 3, kind: input, shape index: {}]
  %s4 = inlined_call_operand.vmem [shape: f32[128,1], index: 4, kind: input, shape index: {}]
  %s5 = inlined_call_operand.hbm [shape: f32[2,128,256], index: 5, kind: output, shape index: {}]
  %s6 = sld [smem:[#allocation0]]
  $region57: #{tpu_custom_call.1} parent=0
    _
  %s8 = ssub.s32 1, %s6
  %s9 = scalar_select 0, %s8, %s6
  $region1: #{tpu_custom_call.1} parent=0
    #allocation2 [shape = 'u8[262144]{0}', space=vmem, size = 0x40000, scoped, tag = 'input window, operand 0']
    #allocation3 [shape = 's32[2]{0}', space=sflag, size = 0x8, scoped, tag = 'scoped memory for tpu_custom_call.1']
    #allocation4 [shape = 's32[2]{0}', space=sflag, size = 0x8, scoped, tag = 'scoped memory for tpu_custom_call.1']
    #allocation5 [shape = 'u8[262144]{0}', space=vmem, size = 0x40000, scoped, tag = 'output window, operand 0']
    %10 = vsyncpa [#allocation3], 0
    %s11 = scalar_lea.sflag [#allocation3], 1
    %12 = vsyncpa %s11, 0
    %13 = vsyncpa [#allocation4], 0
    %s14 = scalar_lea.sflag [#allocation4], 1
    %15 = vsyncpa %s14, 0
    loop: start=0, step=1, limit=4
    $region2: #{tpu_custom_call.1} parent=1 // loop_pre_header
      _
    $region3: #{tpu_custom_call.1} parent=1 // loop_header
      %s17 = sphi 0, %s21
      %p18 = scmp.ge.s32.totalorder %s17, 4
      %s27 = sphi 0, %s29
      %s30 = sphi 0, %s27
      %s31 = sphi 0, %s30
      %s47 = sphi 0, %s31
      %s51 = sphi 0, %s51
      %s53 = sphi 0, %s51
      %s54 = sphi 0, %s53
      %s68 = sphi 0, %s54
      %s72 = sphi 0, %s72
      %s74 = sphi 0, %s72
      %s75 = sphi 0, %s74
      %s89 = sphi 0, %s75
      %s93 = sphi 0, %s93
      %s95 = sphi 0, %s93
      %s96 = sphi 0, %s95
      %s110 = sphi 0, %s96
      %s114 = sphi 0, %s114
      %s116 = sphi 0, %s114
      %s117 = sphi 0, %s116
      %s131 = sphi 0, %s117
      %s137 = sphi 0, %s139
      %s140 = sphi 0, %s137
      %s141 = sphi 0, %s140
      %s157 = sphi 0, %s141
    $region4: #{tpu_custom_call.1} parent=1 // loop_header_branch
      %20 = sbr.rel (%p18) target = $region8
    $region5: #{tpu_custom_call.1} parent=1 // loop_body
      %s22 = ssub.s32 %s17, 1
      %s23 = ssub.s32 %s17, 2
      %s24 = sadd.s32 %s17, 1
      %s25 = ssub.s32 %s17, %s24
      %p26 = scmp.eq.s32.totalorder %s25, 0
      %s28 = sadd.s32 %s27, 1
      %s29 = scalar_select %p26, %s27, %s28
      %p32 = pneg %p26
      %p33 = scmp.eq.s32.totalorder %s17, 1
      %p34 = por %p32, %p33
      %p35 = scmp.ne.s32.totalorder %s27, %s30
      %p36 = scmp.eq.s32.totalorder %s17, 0
      %p37 = por %p35, %p36
      %p38 = scmp.ne.s32.totalorder %s27, %s30
      %p39 = scmp.eq.s32.totalorder %s22, 1
      %p40 = por %p38, %p39
      %p41 = scmp.ne.s32.totalorder %s30, %s31
      %p42 = scmp.eq.s32.totalorder %s22, 0
      %p43 = por %p41, %p42
      %p44 = scmp.ne.s32.totalorder %s30, %s31
      %p45 = scmp.eq.s32.totalorder %s23, 1
      %p46 = por %p44, %p45
      %p48 = scmp.ne.s32.totalorder %s31, %s47
      %p49 = scmp.eq.s32.totalorder %s23, 0
      %p50 = por %p48, %p49
      %s52 = sadd.s32 %s51, 1
      %p55 = scmp.eq.s32.totalorder %s17, 1
      %p56 = scmp.ne.s32.totalorder %s51, %s53
      %p57 = scmp.eq.s32.totalorder %s17, 0
      %p58 = por %p56, %p57
      %p59 = scmp.ne.s32.totalorder %s51, %s53
      %p60 = scmp.eq.s32.totalorder %s22, 1
      %p61 = por %p59, %p60
      %p62 = scmp.ne.s32.totalorder %s53, %s54
      %p63 = scmp.eq.s32.totalorder %s22, 0
      %p64 = por %p62, %p63
      %p65 = scmp.ne.s32.totalorder %s53, %s54
      %p66 = scmp.eq.s32.totalorder %s23, 1
      %p67 = por %p65, %p66
      %p69 = scmp.ne.s32.totalorder %s54, %s68
      %p70 = scmp.eq.s32.totalorder %s23, 0
      %p71 = por %p69, %p70
      %s73 = sadd.s32 %s72, 1
      %p76 = scmp.eq.s32.totalorder %s17, 1
      %p77 = scmp.ne.s32.totalorder %s72, %s74
      %p78 = scmp.eq.s32.totalorder %s17, 0
      %p79 = por %p77, %p78
      %p80 = scmp.ne.s32.totalorder %s72, %s74
      %p81 = scmp.eq.s32.totalorder %s22, 1
      %p82 = por %p80, %p81
      %p83 = scmp.ne.s32.totalorder %s74, %s75
      %p84 = scmp.eq.s32.totalorder %s22, 0
      %p85 = por %p83, %p84
      %p86 = scmp.ne.s32.totalorder %s74, %s75
      %p87 = scmp.eq.s32.totalorder %s23, 1
      %p88 = por %p86, %p87
      %p90 = scmp.ne.s32.totalorder %s75, %s89
      %p91 = scmp.eq.s32.totalorder %s23, 0
      %p92 = por %p90, %p91
      %s94 = sadd.s32 %s93, 1
      %p97 = scmp.eq.s32.totalorder %s17, 1
      %p98 = scmp.ne.s32.totalorder %s93, %s95
      %p99 = scmp.eq.s32.totalorder %s17, 0
      %p100 = por %p98, %p99
      %p101 = scmp.ne.s32.totalorder %s93, %s95
      %p102 = scmp.eq.s32.totalorder %s22, 1
      %p103 = por %p101, %p102
      %p104 = scmp.ne.s32.totalorder %s95, %s96
      %p105 = scmp.eq.s32.totalorder %s22, 0
      %p106 = por %p104, %p105
      %p107 = scmp.ne.s32.totalorder %s95, %s96
      %p108 = scmp.eq.s32.totalorder %s23, 1
      %p109 = por %p107, %p108
      %p111 = scmp.ne.s32.totalorder %s96, %s110
      %p112 = scmp.eq.s32.totalorder %s23, 0
      %p113 = por %p111, %p112
      %s115 = sadd.s32 %s114, 1
      %p118 = scmp.eq.s32.totalorder %s17, 1
      %p119 = scmp.ne.s32.totalorder %s114, %s116
      %p120 = scmp.eq.s32.totalorder %s17, 0
      %p121 = por %p119, %p120
      %p122 = scmp.ne.s32.totalorder %s114, %s116
      %p123 = scmp.eq.s32.totalorder %s22, 1
      %p124 = por %p122, %p123
      %p125 = scmp.ne.s32.totalorder %s116, %s117
      %p126 = scmp.eq.s32.totalorder %s22, 0
      %p127 = por %p125, %p126
      %p128 = scmp.ne.s32.totalorder %s116, %s117
      %p129 = scmp.eq.s32.totalorder %s23, 1
      %p130 = por %p128, %p129
      %p132 = scmp.ne.s32.totalorder %s117, %s131
      %p133 = scmp.eq.s32.totalorder %s23, 0
      %p134 = por %p132, %p133
      %s135 = ssub.s32 %s17, %s24
      %p136 = scmp.eq.s32.totalorder %s135, 0
      %s138 = sadd.s32 %s137, 1
      %s139 = scalar_select %p136, %s137, %s138
      %p142 = pneg %p136
      %p143 = scmp.eq.s32.totalorder %s17, 1
      %p144 = por %p142, %p143
      %p145 = scmp.ne.s32.totalorder %s137, %s140
      %p146 = scmp.eq.s32.totalorder %s17, 0
      %p147 = por %p145, %p146
      %p148 = scmp.ne.s32.totalorder %s137, %s140
      %p149 = scmp.eq.s32.totalorder %s22, 1
      %p150 = por %p148, %p149
      %p151 = scmp.ne.s32.totalorder %s140, %s141
      %p152 = scmp.eq.s32.totalorder %s22, 0
      %p153 = por %p151, %p152
      %p154 = scmp.ne.s32.totalorder %s140, %s141
      %p155 = scmp.eq.s32.totalorder %s23, 1
      %p156 = por %p154, %p155
      %p158 = scmp.ne.s32.totalorder %s141, %s157
      %p159 = scmp.eq.s32.totalorder %s23, 0
      %p160 = por %p158, %p159
      %p161 = scmp.le.s32.totalorder 1, %s17
      %p162 = scmp.lt.s32.totalorder %s17, 3
      %p163 = pnand %p161, %p162
      %p164 = pneg %p163
      // Predicated region
      $region9: #{tpu_custom_call.1} parent=5 // pred_check
        _
      $region10: #{tpu_custom_call.1} parent=5 // pred_check_branch
        %166 = sbr.rel (%p163) target = $region12
      $region11: #{tpu_custom_call.1} parent=5 // pred_region
        %s167 = ssub.s32 %s17, 1
        // Predicated region
        $region13: #{tpu_custom_call.1} parent=11 // pred_check
          %p168 = pneg %p64
        $region14: #{tpu_custom_call.1} parent=11 // pred_check_branch
          %170 = sbr.rel (%p168) target = $region16
        $region15: #{tpu_custom_call.1} parent=11 // pred_region
          _
        $region16: #{tpu_custom_call.1} parent=11 // pred_fallthru
          _
        // Predicated region
        $region17: #{tpu_custom_call.1} parent=11 // pred_check
          %p171 = pneg %p85
        $region18: #{tpu_custom_call.1} parent=11 // pred_check_branch
          %173 = sbr.rel (%p171) target = $region20
        $region19: #{tpu_custom_call.1} parent=11 // pred_region
          _
        $region20: #{tpu_custom_call.1} parent=11 // pred_fallthru
          _
        // Predicated region
        $region21: #{tpu_custom_call.1} parent=11 // pred_check
          %p174 = pneg %p106
        $region22: #{tpu_custom_call.1} parent=11 // pred_check_branch
          %176 = sbr.rel (%p174) target = $region24
        $region23: #{tpu_custom_call.1} parent=11 // pred_region
          _
        $region24: #{tpu_custom_call.1} parent=11 // pred_fallthru
          _
        // Predicated region
        $region25: #{tpu_custom_call.1} parent=11 // pred_check
          %p177 = pneg %p127
        $region26: #{tpu_custom_call.1} parent=11 // pred_check_branch
          %179 = sbr.rel (%p177) target = $region28
        $region27: #{tpu_custom_call.1} parent=11 // pred_region
          _
        $region28: #{tpu_custom_call.1} parent=11 // pred_fallthru
          _
      $region12: #{tpu_custom_call.1} parent=5 // pred_fallthru
        _
      %p180 = scmp.lt.s32.totalorder %s17, 2
      // Predicated region
      $region29: #{tpu_custom_call.1} parent=5 // pred_check
        %p181 = pneg %p180
      $region30: #{tpu_custom_call.1} parent=5 // pred_check_branch
        %183 = sbr.rel (%p181) target = $region32
      $region31: #{tpu_custom_call.1} parent=5 // pred_region
        // Predicated region
        $region33: #{tpu_custom_call.1} parent=31 // pred_check
          %p184 = pneg %p37
        $region34: #{tpu_custom_call.1} parent=31 // pred_check_branch
          %186 = sbr.rel (%p184) target = $region36
        $region35: #{tpu_custom_call.1} parent=31 // pred_region
          %s187 = sand.u32 %s27, 1
          %s188 = scalar_lea.sflag [#allocation3], %s187
          %s189 = sand.u32 %s27, 1
          %s190 = smul.addr %s189, 256
          %s191 = scalar_lea.vmem [#allocation2], %s190
          %193 = vsyncadd %s188, 0
          %s194 = smul.addr %s17, 32
          %s195 = smul.addr %s194, 8
          %s196 = scalar_lea.hbm %s0, %s195
          %s197 = sshll.u32 %s196, 4
          %s198 = int_to_ptr.hbm [resolvable:$true] %s197
          %s199 = sshll.u32 %s191, 4
          %s200 = int_to_ptr.vmem [resolvable:$true] %s199
          %205 = dma.hbm_to_vmem [thread:$0]  %s198, 4096, %s200, %s188, 256, 256, 16
        $region36: #{tpu_custom_call.1} parent=31 // pred_fallthru
          _
      $region32: #{tpu_custom_call.1} parent=5 // pred_fallthru
        _
      %p206 = scmp.le.s32.totalorder 1, %s17
      %p207 = scmp.lt.s32.totalorder %s17, 3
      %p208 = pnand %p206, %p207
      %p209 = pneg %p208
      // Predicated region
      $region37: #{tpu_custom_call.1} parent=5 // pred_check
        _
      $region38: #{tpu_custom_call.1} parent=5 // pred_check_branch
        %211 = sbr.rel (%p208) target = $region40
      $region39: #{tpu_custom_call.1} parent=5 // pred_region
        %s212 = ssub.s32 %s17, 1
        %s213 = sand.u32 %s30, 1
        %s214 = scalar_lea.sflag [#allocation3], %s213
        %s215 = sand.u32 %s30, 1
        %s216 = smul.addr %s215, 256
        %s217 = scalar_lea.vmem [#allocation2], %s216
        // Predicated region
        $region41: #{tpu_custom_call.1} parent=39 // pred_check
          %p218 = pneg %p43
        $region42: #{tpu_custom_call.1} parent=39 // pred_check_branch
          %220 = sbr.rel (%p218) target = $region44
        $region43: #{tpu_custom_call.1} parent=39 // pred_region
          %222 = dma.done %s214, 4096
        $region44: #{tpu_custom_call.1} parent=39 // pred_fallthru
          _
        %s223 = sand.u32 %s30, 1
        %s224 = scalar_lea.sflag [#allocation3], %s223
        %s225 = sand.u32 %s30, 1
        %s226 = smul.addr %s225, 256
        %s227 = scalar_lea.vmem [#allocation2], %s226
        %p228 = pneg %p43
        %p229 = pneg %p40
        %p230 = pneg %p64
        %p231 = pneg %p61
        %p232 = pneg %p85
        %p233 = pneg %p82
        %p234 = pneg %p106
        %p235 = pneg %p103
        %p236 = pneg %p127
        %p237 = pneg %p124
        %p238 = pneg %p153
        %p239 = pneg %p150
        %s240 = sand.u32 %s140, 1
        %s241 = scalar_lea.sflag [#allocation4], %s240
        %s242 = sand.u32 %s140, 1
        %s243 = smul.addr %s242, 256
        %s244 = scalar_lea.vmem [#allocation5], %s243
        %v245 = vld [vmem:[%s217] sm:$0xff]
        %v246 = vld [vmem:[%s217 + $0x8] sm:$0xff]
        %v247 = vld [vmem:[%s217 + $0x10] sm:$0xff]
        %v248 = vld [vmem:[%s217 + $0x18] sm:$0xff]
        %v249 = vld [vmem:[%s217 + $0x20] sm:$0xff]
        %v250 = vld [vmem:[%s217 + $0x28] sm:$0xff]
        %v251 = vld [vmem:[%s217 + $0x30] sm:$0xff]
        %v252 = vld [vmem:[%s217 + $0x38] sm:$0xff]
        %v253 = vld [vmem:[%s217 + $0x40] sm:$0xff]
        %v254 = vld [vmem:[%s217 + $0x48] sm:$0xff]
        %v255 = vld [vmem:[%s217 + $0x50] sm:$0xff]
        %v256 = vld [vmem:[%s217 + $0x58] sm:$0xff]
        %v257 = vld [vmem:[%s217 + $0x60] sm:$0xff]
        %v258 = vld [vmem:[%s217 + $0x68] sm:$0xff]
        %v259 = vld [vmem:[%s217 + $0x70] sm:$0xff]
        %v260 = vld [vmem:[%s217 + $0x78] sm:$0xff]
        %v261 = vld [vmem:[%s217 + $0x80] sm:$0xff]
        %v262 = vld [vmem:[%s217 + $0x88] sm:$0xff]
        %v263 = vld [vmem:[%s217 + $0x90] sm:$0xff]
        %v264 = vld [vmem:[%s217 + $0x98] sm:$0xff]
        %v265 = vld [vmem:[%s217 + $0xa0] sm:$0xff]
        %v266 = vld [vmem:[%s217 + $0xa8] sm:$0xff]
        %v267 = vld [vmem:[%s217 + $0xb0] sm:$0xff]
        %v268 = vld [vmem:[%s217 + $0xb8] sm:$0xff]
        %v269 = vld [vmem:[%s217 + $0xc0] sm:$0xff]
        %v270 = vld [vmem:[%s217 + $0xc8] sm:$0xff]
        %v271 = vld [vmem:[%s217 + $0xd0] sm:$0xff]
        %v272 = vld [vmem:[%s217 + $0xd8] sm:$0xff]
        %v273 = vld [vmem:[%s217 + $0xe0] sm:$0xff]
        %v274 = vld [vmem:[%s217 + $0xe8] sm:$0xff]
        %v275 = vld [vmem:[%s217 + $0xf0] sm:$0xff]
        %v276 = vld [vmem:[%s217 + $0xf8] sm:$0xff]
        %v277 = vld [vmem:[%s1] sm:$0xff]
        %v278 = vld [vmem:[%s2] sm:$0xff]
        %280 = vset.pattern.permute.xlu0 0
        %281 = vperm.xlu0 %280, %v278
        %v282 = vpop.permute.xlu0 %281
        %284 = vmatpush.msra.mxu0 %v275
        %285 = vmatpush.msra.mxu0 %v273
        %286 = vmatpush.msra.mxu0 %v271
        %287 = vmatpush.msra.mxu0 %v269
        %288 = vmatpush.msra.mxu0 %v267
        %289 = vmatpush.msra.mxu0 %v265
        %290 = vmatpush.msra.mxu0 %v263
        %291 = vmatpush.msra.mxu0 %v261
        %292 = vmatpush.msra.mxu0 %v259
        %293 = vmatpush.msra.mxu0 %v257
        %294 = vmatpush.msra.mxu0 %v255
        %295 = vmatpush.msra.mxu0 %v253
        %296 = vmatpush.msra.mxu0 %v251
        %297 = vmatpush.msra.mxu0 %v249
        %298 = vmatpush.msra.mxu0 %v247
        %299 = vmatpush.msra.mxu0 %v245
        %300 = vmatmul.f32.gmra.mxu0 %v277
        %v301 = vpop.f32.mrf.mxu0
        %v302 = vadd.f32 %v282, %v301
        %303 = vdwg.mxu0
        %304 = vmatpush.msra.mxu0 %v276
        %305 = vmatpush.msra.mxu0 %v274
        %306 = vmatpush.msra.mxu0 %v272
        %307 = vmatpush.msra.mxu0 %v270
        %308 = vmatpush.msra.mxu0 %v268
        %309 = vmatpush.msra.mxu0 %v266
        %310 = vmatpush.msra.mxu0 %v264
        %311 = vmatpush.msra.mxu0 %v262
        %312 = vmatpush.msra.mxu0 %v260
        %313 = vmatpush.msra.mxu0 %v258
        %314 = vmatpush.msra.mxu0 %v256
        %315 = vmatpush.msra.mxu0 %v254
        %316 = vmatpush.msra.mxu0 %v252
        %317 = vmatpush.msra.mxu0 %v250
        %318 = vmatpush.msra.mxu0 %v248
        %319 = vmatpush.msra.mxu0 %v246
        %320 = vmatmul.f32.gmra.mxu0 %v277
        %v321 = vpop.f32.mrf.mxu0
        %v322 = vadd.f32 %v282, %v321
        %323 = vdwg.mxu0
        %v326 = vrot.slane %v302, 1
        %v327 = vrot.slane %v322, 1
        %v330 = vmul.f32 %v302, %v326
        %v331 = vmul.f32 %v322, %v327
        %vm332 = vcmask 1040384
        %v333 = vsel %vm332, %v330, 0.0
        %v334 = vsel %vm332, %v331, 0.0
        %v335 = vadd.f32 %v333, %v334
        %336 = vadd.xlane.f32.xlu0 %v335
        %v337 = vpop.xlane.xlu0 %336
        %v339 = vrot.slane %v337, 6
        %v341 = vmul.f32 %v302, %v339
        %v342 = vmul.f32 %v322, %v339
        %v343 = vld [vmem:[%s3] sm:$0xff]
        %v344 = vld [vmem:[%s3 + $0x8] sm:$0xff]
        %v345 = vld [vmem:[%s3 + $0x10] sm:$0xff]
        %v346 = vld [vmem:[%s3 + $0x18] sm:$0xff]
        %v347 = vld [vmem:[%s3 + $0x20] sm:$0xff]
        %v348 = vld [vmem:[%s3 + $0x28] sm:$0xff]
        %v349 = vld [vmem:[%s3 + $0x30] sm:$0xff]
        %v350 = vld [vmem:[%s3 + $0x38] sm:$0xff]
        %v351 = vld [vmem:[%s3 + $0x40] sm:$0xff]
        %v352 = vld [vmem:[%s3 + $0x48] sm:$0xff]
        %v353 = vld [vmem:[%s3 + $0x50] sm:$0xff]
        %v354 = vld [vmem:[%s3 + $0x58] sm:$0xff]
        %v355 = vld [vmem:[%s3 + $0x60] sm:$0xff]
        %v356 = vld [vmem:[%s3 + $0x68] sm:$0xff]
        %v357 = vld [vmem:[%s3 + $0x70] sm:$0xff]
        %v358 = vld [vmem:[%s3 + $0x78] sm:$0xff]
        %360 = vset.pattern.permute.xlu0 0
        %361 = vperm.xlu0 %360, %v343
        %v362 = vpop.permute.xlu0 %361
        %365 = vset.pattern.permute.xlu0 0
        %366 = vperm.xlu0 %365, %v344
        %v367 = vpop.permute.xlu0 %366
        %370 = vset.pattern.permute.xlu0 0
        %371 = vperm.xlu0 %370, %v345
        %v372 = vpop.permute.xlu0 %371
        %375 = vset.pattern.permute.xlu0 0
        %376 = vperm.xlu0 %375, %v346
        %v377 = vpop.permute.xlu0 %376
        %380 = vset.pattern.permute.xlu0 0
        %381 = vperm.xlu0 %380, %v347
        %v382 = vpop.permute.xlu0 %381
        %385 = vset.pattern.permute.xlu0 0
        %386 = vperm.xlu0 %385, %v348
        %v387 = vpop.permute.xlu0 %386
        %390 = vset.pattern.permute.xlu0 0
        %391 = vperm.xlu0 %390, %v349
        %v392 = vpop.permute.xlu0 %391
        %395 = vset.pattern.permute.xlu0 0
        %396 = vperm.xlu0 %395, %v350
        %v397 = vpop.permute.xlu0 %396
        %400 = vset.pattern.permute.xlu0 0
        %401 = vperm.xlu0 %400, %v351
        %v402 = vpop.permute.xlu0 %401
        %405 = vset.pattern.permute.xlu0 0
        %406 = vperm.xlu0 %405, %v352
        %v407 = vpop.permute.xlu0 %406
        %410 = vset.pattern.permute.xlu0 0
        %411 = vperm.xlu0 %410, %v353
        %v412 = vpop.permute.xlu0 %411
        %415 = vset.pattern.permute.xlu0 0
        %416 = vperm.xlu0 %415, %v354
        %v417 = vpop.permute.xlu0 %416
        %420 = vset.pattern.permute.xlu0 0
        %421 = vperm.xlu0 %420, %v355
        %v422 = vpop.permute.xlu0 %421
        %425 = vset.pattern.permute.xlu0 0
        %426 = vperm.xlu0 %425, %v356
        %v427 = vpop.permute.xlu0 %426
        %430 = vset.pattern.permute.xlu0 0
        %431 = vperm.xlu0 %430, %v357
        %v432 = vpop.permute.xlu0 %431
        %435 = vset.pattern.permute.xlu0 0
        %436 = vperm.xlu0 %435, %v358
        %v437 = vpop.permute.xlu0 %436
        %v439 = vperm.slane %v341, 2
        %v440 = vperm.slane %v342, 2
        %v441 = vmul.f32 %v362, %v439
        %v442 = vmul.f32 %v362, %v440
        %v443 = vmul.f32 %v367, %v439
        %v444 = vmul.f32 %v367, %v440
        %v445 = vmul.f32 %v372, %v439
        %v446 = vmul.f32 %v372, %v440
        %v447 = vmul.f32 %v377, %v439
        %v448 = vmul.f32 %v377, %v440
        %v449 = vmul.f32 %v382, %v439
        %v450 = vmul.f32 %v382, %v440
        %v451 = vmul.f32 %v387, %v439
        %v452 = vmul.f32 %v387, %v440
        %v453 = vmul.f32 %v392, %v439
        %v454 = vmul.f32 %v392, %v440
        %v455 = vmul.f32 %v397, %v439
        %v456 = vmul.f32 %v397, %v440
        %v457 = vmul.f32 %v402, %v439
        %v458 = vmul.f32 %v402, %v440
        %v459 = vmul.f32 %v407, %v439
        %v460 = vmul.f32 %v407, %v440
        %v461 = vmul.f32 %v412, %v439
        %v462 = vmul.f32 %v412, %v440
        %v463 = vmul.f32 %v417, %v439
        %v464 = vmul.f32 %v417, %v440
        %v465 = vmul.f32 %v422, %v439
        %v466 = vmul.f32 %v422, %v440
        %v467 = vmul.f32 %v427, %v439
        %v468 = vmul.f32 %v427, %v440
        %v469 = vmul.f32 %v432, %v439
        %v470 = vmul.f32 %v432, %v440
        %v471 = vmul.f32 %v437, %v439
        %v472 = vmul.f32 %v437, %v440
        %v473 = vld [vmem:[%s4] sm:$0xff]
        %v474 = vld [vmem:[%s4 + $0x8] sm:$0xff]
        %v475 = vld [vmem:[%s4 + $0x10] sm:$0xff]
        %v476 = vld [vmem:[%s4 + $0x18] sm:$0xff]
        %v477 = vld [vmem:[%s4 + $0x20] sm:$0xff]
        %v478 = vld [vmem:[%s4 + $0x28] sm:$0xff]
        %v479 = vld [vmem:[%s4 + $0x30] sm:$0xff]
        %v480 = vld [vmem:[%s4 + $0x38] sm:$0xff]
        %v481 = vld [vmem:[%s4 + $0x40] sm:$0xff]
        %v482 = vld [vmem:[%s4 + $0x48] sm:$0xff]
        %v483 = vld [vmem:[%s4 + $0x50] sm:$0xff]
        %v484 = vld [vmem:[%s4 + $0x58] sm:$0xff]
        %v485 = vld [vmem:[%s4 + $0x60] sm:$0xff]
        %v486 = vld [vmem:[%s4 + $0x68] sm:$0xff]
        %v487 = vld [vmem:[%s4 + $0x70] sm:$0xff]
        %v488 = vld [vmem:[%s4 + $0x78] sm:$0xff]
        %490 = vset.pattern.permute.xlu0 0
        %491 = vperm.xlu0 %490, %v473
        %v492 = vpop.permute.xlu0 %491
        %495 = vset.pattern.permute.xlu0 0
        %496 = vperm.xlu0 %495, %v474
        %v497 = vpop.permute.xlu0 %496
        %500 = vset.pattern.permute.xlu0 0
        %501 = vperm.xlu0 %500, %v475
        %v502 = vpop.permute.xlu0 %501
        %505 = vset.pattern.permute.xlu0 0
        %506 = vperm.xlu0 %505, %v476
        %v507 = vpop.permute.xlu0 %506
        %510 = vset.pattern.permute.xlu0 0
        %511 = vperm.xlu0 %510, %v477
        %v512 = vpop.permute.xlu0 %511
        %515 = vset.pattern.permute.xlu0 0
        %516 = vperm.xlu0 %515, %v478
        %v517 = vpop.permute.xlu0 %516
        %520 = vset.pattern.permute.xlu0 0
        %521 = vperm.xlu0 %520, %v479
        %v522 = vpop.permute.xlu0 %521
        %525 = vset.pattern.permute.xlu0 0
        %526 = vperm.xlu0 %525, %v480
        %v527 = vpop.permute.xlu0 %526
        %530 = vset.pattern.permute.xlu0 0
        %531 = vperm.xlu0 %530, %v481
        %v532 = vpop.permute.xlu0 %531
        %535 = vset.pattern.permute.xlu0 0
        %536 = vperm.xlu0 %535, %v482
        %v537 = vpop.permute.xlu0 %536
        %540 = vset.pattern.permute.xlu0 0
        %541 = vperm.xlu0 %540, %v483
        %v542 = vpop.permute.xlu0 %541
        %545 = vset.pattern.permute.xlu0 0
        %546 = vperm.xlu0 %545, %v484
        %v547 = vpop.permute.xlu0 %546
        %550 = vset.pattern.permute.xlu0 0
        %551 = vperm.xlu0 %550, %v485
        %v552 = vpop.permute.xlu0 %551
        %555 = vset.pattern.permute.xlu0 0
        %556 = vperm.xlu0 %555, %v486
        %v557 = vpop.permute.xlu0 %556
        %560 = vset.pattern.permute.xlu0 0
        %561 = vperm.xlu0 %560, %v487
        %v562 = vpop.permute.xlu0 %561
        %565 = vset.pattern.permute.xlu0 0
        %566 = vperm.xlu0 %565, %v488
        %v567 = vpop.permute.xlu0 %566
        %v569 = vadd.f32 %v441, %v492
        %v570 = vadd.f32 %v442, %v492
        %v571 = vadd.f32 %v443, %v497
        %v572 = vadd.f32 %v444, %v497
        %v573 = vadd.f32 %v445, %v502
        %v574 = vadd.f32 %v446, %v502
        %v575 = vadd.f32 %v447, %v507
        %v576 = vadd.f32 %v448, %v507
        %v577 = vadd.f32 %v449, %v512
        %v578 = vadd.f32 %v450, %v512
        %v579 = vadd.f32 %v451, %v517
        %v580 = vadd.f32 %v452, %v517
        %v581 = vadd.f32 %v453, %v522
        %v582 = vadd.f32 %v454, %v522
        %v583 = vadd.f32 %v455, %v527
        %v584 = vadd.f32 %v456, %v527
        %v585 = vadd.f32 %v457, %v532
        %v586 = vadd.f32 %v458, %v532
        %v587 = vadd.f32 %v459, %v537
        %v588 = vadd.f32 %v460, %v537
        %v589 = vadd.f32 %v461, %v542
        %v590 = vadd.f32 %v462, %v542
        %v591 = vadd.f32 %v463, %v547
        %v592 = vadd.f32 %v464, %v547
        %v593 = vadd.f32 %v465, %v552
        %v594 = vadd.f32 %v466, %v552
        %v595 = vadd.f32 %v467, %v557
        %v596 = vadd.f32 %v468, %v557
        %v597 = vadd.f32 %v469, %v562
        %v598 = vadd.f32 %v470, %v562
        %v599 = vadd.f32 %v471, %v567
        %v600 = vadd.f32 %v472, %v567
        %v601 = vadd.f32 %v569, %v245
        %v602 = vadd.f32 %v570, %v246
        %v603 = vadd.f32 %v571, %v247
        %v604 = vadd.f32 %v572, %v248
        %v605 = vadd.f32 %v573, %v249
        %v606 = vadd.f32 %v574, %v250
        %v607 = vadd.f32 %v575, %v251
        %v608 = vadd.f32 %v576, %v252
        %v609 = vadd.f32 %v577, %v253
        %v610 = vadd.f32 %v578, %v254
        %v611 = vadd.f32 %v579, %v255
        %v612 = vadd.f32 %v580, %v256
        %v613 = vadd.f32 %v581, %v257
        %v614 = vadd.f32 %v582, %v258
        %v615 = vadd.f32 %v583, %v259
        %v616 = vadd.f32 %v584, %v260
        %v617 = vadd.f32 %v585, %v261
        %v618 = vadd.f32 %v586, %v262
        %v619 = vadd.f32 %v587, %v263
        %v620 = vadd.f32 %v588, %v264
        %v621 = vadd.f32 %v589, %v265
        %v622 = vadd.f32 %v590, %v266
        %v623 = vadd.f32 %v591, %v267
        %v624 = vadd.f32 %v592, %v268
        %v625 = vadd.f32 %v593, %v269
        %v626 = vadd.f32 %v594, %v270
        %v627 = vadd.f32 %v595, %v271
        %v628 = vadd.f32 %v596, %v272
        %v629 = vadd.f32 %v597, %v273
        %v630 = vadd.f32 %v598, %v274
        %v631 = vadd.f32 %v599, %v275
        %v632 = vadd.f32 %v600, %v276
        %633 = vst [vmem:[%s244] sm:$0xff] %v601
        %634 = vst [vmem:[%s244 + $0x8] sm:$0xff] %v602
        %635 = vst [vmem:[%s244 + $0x10] sm:$0xff] %v603
        %636 = vst [vmem:[%s244 + $0x18] sm:$0xff] %v604
        %637 = vst [vmem:[%s244 + $0x20] sm:$0xff] %v605
        %638 = vst [vmem:[%s244 + $0x28] sm:$0xff] %v606
        %639 = vst [vmem:[%s244 + $0x30] sm:$0xff] %v607
        %640 = vst [vmem:[%s244 + $0x38] sm:$0xff] %v608
        %641 = vst [vmem:[%s244 + $0x40] sm:$0xff] %v609
        %642 = vst [vmem:[%s244 + $0x48] sm:$0xff] %v610
        %643 = vst [vmem:[%s244 + $0x50] sm:$0xff] %v611
        %644 = vst [vmem:[%s244 + $0x58] sm:$0xff] %v612
        %645 = vst [vmem:[%s244 + $0x60] sm:$0xff] %v613
        %646 = vst [vmem:[%s244 + $0x68] sm:$0xff] %v614
        %647 = vst [vmem:[%s244 + $0x70] sm:$0xff] %v615
        %648 = vst [vmem:[%s244 + $0x78] sm:$0xff] %v616
        %649 = vst [vmem:[%s244 + $0x80] sm:$0xff] %v617
        %650 = vst [vmem:[%s244 + $0x88] sm:$0xff] %v618
        %651 = vst [vmem:[%s244 + $0x90] sm:$0xff] %v619
        %652 = vst [vmem:[%s244 + $0x98] sm:$0xff] %v620
        %653 = vst [vmem:[%s244 + $0xa0] sm:$0xff] %v621
        %654 = vst [vmem:[%s244 + $0xa8] sm:$0xff] %v622
        %655 = vst [vmem:[%s244 + $0xb0] sm:$0xff] %v623
        %656 = vst [vmem:[%s244 + $0xb8] sm:$0xff] %v624
        %657 = vst [vmem:[%s244 + $0xc0] sm:$0xff] %v625
        %658 = vst [vmem:[%s244 + $0xc8] sm:$0xff] %v626
        %659 = vst [vmem:[%s244 + $0xd0] sm:$0xff] %v627
        %660 = vst [vmem:[%s244 + $0xd8] sm:$0xff] %v628
        %661 = vst [vmem:[%s244 + $0xe0] sm:$0xff] %v629
        %662 = vst [vmem:[%s244 + $0xe8] sm:$0xff] %v630
        %663 = vst [vmem:[%s244 + $0xf0] sm:$0xff] %v631
        %664 = vst [vmem:[%s244 + $0xf8] sm:$0xff] %v632
        %s665 = sand.u32 %s140, 1
        %s666 = scalar_lea.sflag [#allocation4], %s665
        %s667 = sand.u32 %s140, 1
        %s668 = smul.addr %s667, 256
        %s669 = scalar_lea.vmem [#allocation5], %s668
        // Predicated region
        $region45: #{tpu_custom_call.1} parent=39 // pred_check
          %p670 = pneg %p150
        $region46: #{tpu_custom_call.1} parent=39 // pred_check_branch
          %672 = sbr.rel (%p670) target = $region48
        $region47: #{tpu_custom_call.1} parent=39 // pred_region
          %674 = vsyncadd %s666, 0
          %s675 = smul.addr %s22, 32
          %s676 = smul.addr %s675, 8
          %s677 = scalar_lea.hbm %s5, %s676
          %s678 = sshll.u32 %s669, 4
          %s679 = int_to_ptr.vmem [resolvable:$true] %s678
          %s680 = sshll.u32 %s677, 4
          %s681 = int_to_ptr.hbm [resolvable:$true] %s680
          %686 = dma.vmem_to_hbm [thread:$0]  %s679, 4096, %s681, %s666, 256, 256, 16
        $region48: #{tpu_custom_call.1} parent=39 // pred_fallthru
          _
      $region40: #{tpu_custom_call.1} parent=5 // pred_fallthru
        _
      %p687 = scmp.le.s32.totalorder 2, %s17
      // Predicated region
      $region49: #{tpu_custom_call.1} parent=5 // pred_check
        %p688 = pneg %p687
      $region50: #{tpu_custom_call.1} parent=5 // pred_check_branch
        %690 = sbr.rel (%p688) target = $region52
      $region51: #{tpu_custom_call.1} parent=5 // pred_region
        %s691 = ssub.s32 %s17, 2
        // Predicated region
        $region53: #{tpu_custom_call.1} parent=51 // pred_check
          %p692 = pneg %p156
        $region54: #{tpu_custom_call.1} parent=51 // pred_check_branch
          %694 = sbr.rel (%p692) target = $region56
        $region55: #{tpu_custom_call.1} parent=51 // pred_region
          %s695 = sand.u32 %s141, 1
          %s696 = scalar_lea.sflag [#allocation4], %s695
          %s697 = sand.u32 %s141, 1
          %s698 = smul.addr %s697, 256
          %s699 = scalar_lea.vmem [#allocation5], %s698
          %701 = dma.done %s696, 4096
        $region56: #{tpu_custom_call.1} parent=51 // pred_fallthru
          _
      $region52: #{tpu_custom_call.1} parent=5 // pred_fallthru
        _
    $region6: #{tpu_custom_call.1} parent=1 // loop_footer
      %s21 = sadd.s32 1, %s17
    $region7: #{tpu_custom_call.1} parent=1 // loop_footer_branch
      %16 = sbr.rel target = $region3
    $region8: #{tpu_custom_call.1} parent=1 // loop_exit
      _
    %702 = vsyncpa [#allocation3], 1
    %s703 = scalar_lea.sflag [#allocation3], 1
    %704 = vsyncpa %s703, 1
    %705 = vsyncpa [#allocation4], 1
    %s706 = scalar_lea.sflag [#allocation4], 1
    %707 = vsyncpa %s706, 1

</llo_original>
